<compile_context>
chip_gen: v6e
topology: v6e:2x2x1
jax: 0.10.0
libtpu: 0.0.40
codegen_flags: <defaults>
</compile_context>

<pallas_src>
import jax
import jax.numpy as jnp
from jax.experimental import pallas as pl
from jax.experimental.pallas import tpu as pltpu

IN_SIZE = 4 * 3 * 2   # 24
H1 = 64
H2 = 32
OUT_SIZE = 3
BN_EPS = 1e-5
MAX_TILE_B = 8192     # rows per grid step; safe on all of v5e/v6e/v7x scoped VMEM


def mlp_v3_kernel(x_ref, w1_ref, b1_ref, w2_ref, b2_ref, w3_ref, b3_ref, o_ref):
    x = x_ref[...]                                                   # (TILE_B, 24)

    # fc1 (+ folded bn1) + relu
    h1 = jnp.dot(x, w1_ref[...], preferred_element_type=jnp.float32) + b1_ref[...]
    h1 = jnp.maximum(h1, 0.0)                                        # (TILE_B, 64)

    # fc2 (+ folded bn2) + relu  (+ dropout == identity in eval)
    h2 = jnp.dot(h1, w2_ref[...], preferred_element_type=jnp.float32) + b2_ref[...]
    h2 = jnp.maximum(h2, 0.0)                                        # (TILE_B, 32)

    # fc3
    o_ref[...] = jnp.dot(h2, w3_ref[...], preferred_element_type=jnp.float32) + b3_ref[...]


def _round_up(n, m):
    return ((n + m - 1) // m) * m


def fold_bn_into_linear(params):
    """Fold eval-mode BatchNorm affine (scale, shift) into the preceding Linear."""
    w1 = params["w1"] * params["s1"]                   # (24, 64) * (1, 64)
    b1 = params["b1"] * params["s1"] + params["t1"]    # (1, 64)
    w2 = params["w2"] * params["s2"]                   # (64, 32) * (1, 32)
    b2 = params["b2"] * params["s2"] + params["t2"]    # (1, 32)
    return w1, b1, w2, b2, params["w3"], params["b3"]


def mlp_v3_forward(x, params, max_tile_b=MAX_TILE_B):
    B = x.shape[0]
    w1, b1, w2, b2, w3, b3 = fold_bn_into_linear(params)

    # Pick a batch tile: multiple of 8 sublanes, capped so the working set fits
    # the scoped-VMEM default on every chip generation.
    tile_b = min(max_tile_b, _round_up(B, 8))
    B_pad = _round_up(B, tile_b)
    if B_pad != B:
        x = jnp.pad(x, ((0, B_pad - B), (0, 0)))
    num_tiles = B_pad // tile_b

    # Weights/biases: constant index_map -> fetched once, VMEM-resident across
    # all grid steps.
    const = lambda shape: pl.BlockSpec(shape, lambda i: (0, 0))

    out = pl.pallas_call(
        mlp_v3_kernel,
        grid=(num_tiles,),
        in_specs=[
            pl.BlockSpec((tile_b, IN_SIZE), lambda i: (i, 0)),
            const(w1.shape), const(b1.shape),
            const(w2.shape), const(b2.shape),
            const(w3.shape), const(b3.shape),
        ],
        out_specs=pl.BlockSpec((tile_b, OUT_SIZE), lambda i: (i, 0)),
        out_shape=jax.ShapeDtypeStruct((B_pad, OUT_SIZE), jnp.float32),
        compiler_params=pltpu.CompilerParams(
            dimension_semantics=("parallel",),   # v7x: shard batch tiles over 2 TCs
        ),
    )(x, w1, b1, w2, b2, w3, b3)

    return out[:B]


def init_params(key):
    ks = jax.random.split(key, 16)
    f32 = jnp.float32

    def linear(kw, kb, fan_in, fan_out):
        bound = 1.0 / jnp.sqrt(f32(fan_in))
        w = jax.random.uniform(kw, (fan_in, fan_out), f32, -bound, bound)  # (in, out) = W^T
        b = jax.random.uniform(kb, (1, fan_out), f32, -bound, bound)
        return w, b

    w1, b1 = linear(ks[0], ks[1], IN_SIZE, H1)
    w2, b2 = linear(ks[2], ks[3], H1, H2)
    w3, b3 = linear(ks[4], ks[5], H2, OUT_SIZE)

    def bn(kg, kb, km, kv, n):
        gamma = 1.0 + 0.1 * jax.random.normal(kg, (1, n), f32)
        beta = 0.1 * jax.random.normal(kb, (1, n), f32)
        running_mean = 0.1 * jax.random.normal(km, (1, n), f32)
        running_var = jnp.abs(1.0 + 0.1 * jax.random.normal(kv, (1, n), f32))
        # fold into affine: y = x * scale + shift
        scale = gamma / jnp.sqrt(running_var + BN_EPS)
        shift = beta - running_mean * scale
        return scale, shift

    s1, t1 = bn(ks[6], ks[7], ks[8], ks[9], H1)
    s2, t2 = bn(ks[10], ks[11], ks[12], ks[13], H2)

    return dict(w1=w1, b1=b1, s1=s1, t1=t1,
                w2=w2, b2=b2, s2=s2, t2=t2,
                w3=w3, b3=b3)


def reference_forward(x, p):
    """Pure-JAX reference matching the PyTorch module (eval mode)."""
    h1 = jnp.maximum((x @ p["w1"] + p["b1"]) * p["s1"] + p["t1"], 0.0)
    h2 = jnp.maximum((h1 @ p["w2"] + p["b2"]) * p["s2"] + p["t2"], 0.0)
    return h2 @ p["w3"] + p["b3"]


if __name__ == "__main__":
    key = jax.random.PRNGKey(0)
    k_x, k_x2, k_p = jax.random.split(key, 3)
    params = init_params(k_p)

    # Case 1: tiny batch (module's natural small shape) -> single grid step.
    batch = 8
    x = jax.random.normal(k_x, (batch, IN_SIZE), jnp.float32)
    out = jax.block_until_ready(mlp_v3_forward(x, params))
    ref = reference_forward(x, params)
    assert out.shape == (batch, OUT_SIZE)
    assert jnp.allclose(out, ref, atol=1e-4, rtol=1e-4)

    # Case 2: ragged batch with a small forced tile -> exercises the multi-step
    # batch grid, VMEM-resident weights, and tail padding/slicing.
    batch2 = 100
    x2 = jax.random.normal(k_x2, (batch2, IN_SIZE), jnp.float32)
    out2 = jax.block_until_ready(mlp_v3_forward(x2, params, max_tile_b=32))
    ref2 = reference_forward(x2, params)
    assert out2.shape == (batch2, OUT_SIZE)
    assert jnp.allclose(out2, ref2, atol=1e-4, rtol=1e-4)

    print("KERNEL_OK")
</pallas_src>

<mosaic_0001>
module attributes {stable_mosaic.version = 11 : i64} {
  func.func @mlp_v3_kernel(%arg0: i32, %arg1: memref<8x24xf32, #tpu.memory_space<vmem>>, %arg2: memref<24x64xf32, #tpu.memory_space<vmem>>, %arg3: memref<1x64xf32, #tpu.memory_space<vmem>>, %arg4: memref<64x32xf32, #tpu.memory_space<vmem>>, %arg5: memref<1x32xf32, #tpu.memory_space<vmem>>, %arg6: memref<32x3xf32, #tpu.memory_space<vmem>>, %arg7: memref<1x3xf32, #tpu.memory_space<vmem>>, %arg8: memref<8x3xf32, #tpu.memory_space<vmem>>) attributes {dimension_semantics = [#tpu.dimension_semantics<parallel>], iteration_bounds = array<i64: 1>, scalar_prefetch = 0 : i64, scratch_operands = 0 : i64, tpu.core_type = #tpu.core_type<tc>, window_params = [{transform_indices = @transform_0, window_bounds = array<i64: 8, 24>}, {pipeline_mode = #tpu.pipeline_mode<synchronous>, transform_indices = @transform_1, window_bounds = array<i64: 24, 64>}, {pipeline_mode = #tpu.pipeline_mode<synchronous>, transform_indices = @transform_2, window_bounds = array<i64: 1, 64>}, {pipeline_mode = #tpu.pipeline_mode<synchronous>, transform_indices = @transform_3, window_bounds = array<i64: 64, 32>}, {pipeline_mode = #tpu.pipeline_mode<synchronous>, transform_indices = @transform_4, window_bounds = array<i64: 1, 32>}, {pipeline_mode = #tpu.pipeline_mode<synchronous>, transform_indices = @transform_5, window_bounds = array<i64: 32, 3>}, {pipeline_mode = #tpu.pipeline_mode<synchronous>, transform_indices = @transform_6, window_bounds = array<i64: 1, 3>}, {transform_indices = @transform_7, window_bounds = array<i64: 8, 3>}]} {
    %c0 = arith.constant 0 : index
    %c0_0 = arith.constant 0 : index
    %0 = vector.load %arg1[%c0, %c0_0] : memref<8x24xf32, #tpu.memory_space<vmem>>, vector<8x24xf32>
    %c0_1 = arith.constant 0 : index
    %c0_2 = arith.constant 0 : index
    %1 = vector.load %arg2[%c0_1, %c0_2] : memref<24x64xf32, #tpu.memory_space<vmem>>, vector<24x64xf32>
    %cst = arith.constant dense<0.000000e+00> : vector<8x64xf32>
    %2 = tpu.matmul %0, %1, %cst {dimension_numbers = #tpu.dot_dimension_numbers<[1], [0], [0], [1], [0, 0, 1, 1], [], []>} : vector<8x24xf32>, vector<24x64xf32>, vector<8x64xf32> -> vector<8x64xf32>
    %c0_3 = arith.constant 0 : index
    %c0_4 = arith.constant 0 : index
    %3 = vector.load %arg3[%c0_3, %c0_4] : memref<1x64xf32, #tpu.memory_space<vmem>>, vector<1x64xf32>
    %4 = vector.broadcast %3 : vector<1x64xf32> to vector<8x64xf32>
    %5 = arith.addf %2, %4 : vector<8x64xf32>
    %cst_5 = arith.constant 0.000000e+00 : f32
    %6 = vector.broadcast %cst_5 : f32 to vector<8x64xf32>
    %7 = arith.maximumf %5, %6 : vector<8x64xf32>
    %c0_6 = arith.constant 0 : index
    %c0_7 = arith.constant 0 : index
    %8 = vector.load %arg4[%c0_6, %c0_7] : memref<64x32xf32, #tpu.memory_space<vmem>>, vector<64x32xf32>
    %cst_8 = arith.constant dense<0.000000e+00> : vector<8x32xf32>
    %9 = tpu.matmul %7, %8, %cst_8 {dimension_numbers = #tpu.dot_dimension_numbers<[1], [0], [0], [1], [0, 0, 1, 1], [], []>} : vector<8x64xf32>, vector<64x32xf32>, vector<8x32xf32> -> vector<8x32xf32>
    %c0_9 = arith.constant 0 : index
    %c0_10 = arith.constant 0 : index
    %10 = vector.load %arg5[%c0_9, %c0_10] : memref<1x32xf32, #tpu.memory_space<vmem>>, vector<1x32xf32>
    %11 = vector.broadcast %10 : vector<1x32xf32> to vector<8x32xf32>
    %12 = arith.addf %9, %11 : vector<8x32xf32>
    %cst_11 = arith.constant 0.000000e+00 : f32
    %13 = vector.broadcast %cst_11 : f32 to vector<8x32xf32>
    %14 = arith.maximumf %12, %13 : vector<8x32xf32>
    %c0_12 = arith.constant 0 : index
    %c0_13 = arith.constant 0 : index
    %15 = vector.load %arg6[%c0_12, %c0_13] : memref<32x3xf32, #tpu.memory_space<vmem>>, vector<32x3xf32>
    %cst_14 = arith.constant dense<0.000000e+00> : vector<8x3xf32>
    %16 = tpu.matmul %14, %15, %cst_14 {dimension_numbers = #tpu.dot_dimension_numbers<[1], [0], [0], [1], [0, 0, 1, 1], [], []>} : vector<8x32xf32>, vector<32x3xf32>, vector<8x3xf32> -> vector<8x3xf32>
    %c0_15 = arith.constant 0 : index
    %c0_16 = arith.constant 0 : index
    %17 = vector.load %arg7[%c0_15, %c0_16] : memref<1x3xf32, #tpu.memory_space<vmem>>, vector<1x3xf32>
    %18 = vector.broadcast %17 : vector<1x3xf32> to vector<8x3xf32>
    %19 = arith.addf %16, %18 : vector<8x3xf32>
    %c0_17 = arith.constant 0 : index
    %c0_18 = arith.constant 0 : index
    %20 = vector.load %arg8[%c0_17, %c0_18] : memref<8x3xf32, #tpu.memory_space<vmem>>, vector<8x3xf32>
    tpu.vector_store %arg8[%c0_17, %c0_18], %19 {strides = array<i32>} : memref<8x3xf32, #tpu.memory_space<vmem>>, vector<8x3xf32>,
    return
  }
  func.func @transform_0(%arg0: i32) -> (i32, i32) {
    %c0_i32 = arith.constant 0 : i32
    %c0_i32_0 = arith.constant 0 : i32
    return %arg0, %c0_i32 : i32, i32
  }
  func.func @transform_1(%arg0: i32) -> (i32, i32) {
    %c0_i32 = arith.constant 0 : i32
    %c0_i32_0 = arith.constant 0 : i32
    %c0_i32_1 = arith.constant 0 : i32
    return %c0_i32, %c0_i32_0 : i32, i32
  }
  func.func @transform_2(%arg0: i32) -> (i32, i32) {
    %c0_i32 = arith.constant 0 : i32
    %c0_i32_0 = arith.constant 0 : i32
    %c0_i32_1 = arith.constant 0 : i32
    return %c0_i32, %c0_i32_0 : i32, i32
  }
  func.func @transform_3(%arg0: i32) -> (i32, i32) {
    %c0_i32 = arith.constant 0 : i32
    %c0_i32_0 = arith.constant 0 : i32
    %c0_i32_1 = arith.constant 0 : i32
    return %c0_i32, %c0_i32_0 : i32, i32
  }
  func.func @transform_4(%arg0: i32) -> (i32, i32) {
    %c0_i32 = arith.constant 0 : i32
    %c0_i32_0 = arith.constant 0 : i32
    %c0_i32_1 = arith.constant 0 : i32
    return %c0_i32, %c0_i32_0 : i32, i32
  }
  func.func @transform_5(%arg0: i32) -> (i32, i32) {
    %c0_i32 = arith.constant 0 : i32
    %c0_i32_0 = arith.constant 0 : i32
    %c0_i32_1 = arith.constant 0 : i32
    return %c0_i32, %c0_i32_0 : i32, i32
  }
  func.func @transform_6(%arg0: i32) -> (i32, i32) {
    %c0_i32 = arith.constant 0 : i32
    %c0_i32_0 = arith.constant 0 : i32
    %c0_i32_1 = arith.constant 0 : i32
    return %c0_i32, %c0_i32_0 : i32, i32
  }
  func.func @transform_7(%arg0: i32) -> (i32, i32) {
    %c0_i32 = arith.constant 0 : i32
    %c0_i32_0 = arith.constant 0 : i32
    return %arg0, %c0_i32 : i32, i32
  }
}

</mosaic_0001>

<llo_original>
// kernel: tpu_custom_call.1
$region0: #{tpu_custom_call.1}
  #allocation0 [shape = 'u32[]', space=smem, size = 0x4, offset = 0x4, fixed_abs, tag = 'smem constant byte address 0x4 - core index']
  #allocation1 [shape = 'u32[144,128]{1,0:T(1,128)}', space=vmem, size = 0x12000, scoped, tag = 'internal scratch']
  %s0 = inlined_call_operand.vmem [shape: f32[8,24], index: 0, kind: input, shape index: {}]
  %s1 = inlined_call_operand.vmem [shape: f32[24,64], index: 1, kind: input, shape index: {}]
  %s2 = inlined_call_operand.vmem [shape: f32[1,64], index: 2, kind: input, shape index: {}]
  %s3 = inlined_call_operand.vmem [shape: f32[64,32], index: 3, kind: input, shape index: {}]
  %s4 = inlined_call_operand.vmem [shape: f32[1,32], index: 4, kind: input, shape index: {}]
  %s5 = inlined_call_operand.vmem [shape: f32[32,3], index: 5, kind: input, shape index: {}]
  %s6 = inlined_call_operand.vmem [shape: f32[1,3], index: 6, kind: input, shape index: {}]
  %s7 = inlined_call_operand.vmem [shape: f32[8,3], index: 7, kind: output, shape index: {}]
  %s8 = sld [smem:[#allocation0]]
  $region38: #{tpu_custom_call.1} parent=0
    _
  %s10 = ssub.s32 1, %s8
  %s11 = scalar_select 0, %s10, %s8
  // Predicated region
  $region2: #{tpu_custom_call.1} parent=0 // pred_check
    _
  $region3: #{tpu_custom_call.1} parent=0 // pred_check_branch
    %13 = sbr.rel (0) target = $region5
  $region4: #{tpu_custom_call.1} parent=0 // pred_region
    _
  $region5: #{tpu_custom_call.1} parent=0 // pred_fallthru
    _
  // Predicated region
  $region6: #{tpu_custom_call.1} parent=0 // pred_check
    _
  $region7: #{tpu_custom_call.1} parent=0 // pred_check_branch
    %15 = sbr.rel (0) target = $region9
  $region8: #{tpu_custom_call.1} parent=0 // pred_region
    _
  $region9: #{tpu_custom_call.1} parent=0 // pred_fallthru
    _
  // Predicated region
  $region10: #{tpu_custom_call.1} parent=0 // pred_check
    _
  $region11: #{tpu_custom_call.1} parent=0 // pred_check_branch
    %17 = sbr.rel (0) target = $region13
  $region12: #{tpu_custom_call.1} parent=0 // pred_region
    _
  $region13: #{tpu_custom_call.1} parent=0 // pred_fallthru
    _
  // Predicated region
  $region14: #{tpu_custom_call.1} parent=0 // pred_check
    _
  $region15: #{tpu_custom_call.1} parent=0 // pred_check_branch
    %19 = sbr.rel (0) target = $region17
  $region16: #{tpu_custom_call.1} parent=0 // pred_region
    _
  $region17: #{tpu_custom_call.1} parent=0 // pred_fallthru
    _
  // Predicated region
  $region18: #{tpu_custom_call.1} parent=0 // pred_check
    _
  $region19: #{tpu_custom_call.1} parent=0 // pred_check_branch
    %21 = sbr.rel (0) target = $region21
  $region20: #{tpu_custom_call.1} parent=0 // pred_region
    _
  $region21: #{tpu_custom_call.1} parent=0 // pred_fallthru
    _
  // Predicated region
  $region22: #{tpu_custom_call.1} parent=0 // pred_check
    _
  $region23: #{tpu_custom_call.1} parent=0 // pred_check_branch
    %23 = sbr.rel (0) target = $region25
  $region24: #{tpu_custom_call.1} parent=0 // pred_region
    _
  $region25: #{tpu_custom_call.1} parent=0 // pred_fallthru
    _
  // Predicated region
  $region26: #{tpu_custom_call.1} parent=0 // pred_check
    _
  $region27: #{tpu_custom_call.1} parent=0 // pred_check_branch
    %25 = sbr.rel (0) target = $region29
  $region28: #{tpu_custom_call.1} parent=0 // pred_region
    _
  $region29: #{tpu_custom_call.1} parent=0 // pred_fallthru
    _
  %v26 = vld [vmem:[%s0] sm:$0xff]
  %v27 = vld [vmem:[%s1] sm:$0xff]
  %v28 = vld [vmem:[%s1 + $0x8] sm:$0xff]
  %v29 = vld [vmem:[%s1 + $0x10] sm:$0xff]
  %v30 = vld [vmem:[%s2] sm:$0x1]
  %v32 = vlaneseq
  %v33 = vshrl.u32 %v32, 7
  %v34 = vsub.s32 0, %v33
  %v35 = vrot.slane %v30, %v34
  %vm37 = vcmask 195584
  %v39 = vsel %vm37, %v26, 0
  %41 = vmatprep.subr.mxu0 0.0
  %42 = vmatpush1.msra.mxu0 0.0
  %43 = vmatprep.subr.mxu0 0.0
  %44 = vmatpush1.msra.mxu0 0.0
  %45 = vmatprep.subr.mxu0 0.0
  %46 = vmatpush1.msra.mxu0 0.0
  %47 = vmatprep.subr.mxu0 0.0
  %48 = vmatpush1.msra.mxu0 0.0
  %49 = vmatprep.subr.mxu0 0.0
  %50 = vmatpush1.msra.mxu0 0.0
  %51 = vmatprep.subr.mxu0 0.0
  %52 = vmatpush1.msra.mxu0 0.0
  %53 = vmatprep.subr.mxu0 0.0
  %54 = vmatpush1.msra.mxu0 0.0
  %55 = vmatprep.subr.mxu0 0.0
  %56 = vmatpush1.msra.mxu0 0.0
  %57 = vmatprep.subr.mxu0 0.0
  %58 = vmatpush1.msra.mxu0 0.0
  %59 = vmatprep.subr.mxu0 0.0
  %60 = vmatpush1.msra.mxu0 0.0
  %61 = vmatprep.subr.mxu0 0.0
  %62 = vmatpush1.msra.mxu0 0.0
  %63 = vmatprep.subr.mxu0 0.0
  %64 = vmatpush1.msra.mxu0 0.0
  %65 = vmatprep.subr.mxu0 0.0
  %66 = vmatpush1.msra.mxu0 0.0
  %67 = vmatprep.subr.mxu0 0.0
  %68 = vmatpush1.msra.mxu0 %v29
  %69 = vmatprep.subr.mxu0 0.0
  %70 = vmatpush1.msra.mxu0 %v28
  %71 = vmatprep.subr.mxu0 0.0
  %72 = vmatpush1.msra.mxu0 %v27
  %73 = vmatprep.subr.mxu0 0.0
  %74 = vmatpush2.msra.mxu0 0.0
  %75 = vmatprep.subr.mxu0 0.0
  %76 = vmatpush2.msra.mxu0 0.0
  %77 = vmatprep.subr.mxu0 0.0
  %78 = vmatpush2.msra.mxu0 0.0
  %79 = vmatprep.subr.mxu0 0.0
  %80 = vmatpush2.msra.mxu0 0.0
  %81 = vmatprep.subr.mxu0 0.0
  %82 = vmatpush2.msra.mxu0 0.0
  %83 = vmatprep.subr.mxu0 0.0
  %84 = vmatpush2.msra.mxu0 0.0
  %85 = vmatprep.subr.mxu0 0.0
  %86 = vmatpush2.msra.mxu0 0.0
  %87 = vmatprep.subr.mxu0 0.0
  %88 = vmatpush2.msra.mxu0 0.0
  %89 = vmatprep.subr.mxu0 0.0
  %90 = vmatpush2.msra.mxu0 0.0
  %91 = vmatprep.subr.mxu0 0.0
  %92 = vmatpush2.msra.mxu0 0.0
  %93 = vmatprep.subr.mxu0 0.0
  %94 = vmatpush2.msra.mxu0 0.0
  %95 = vmatprep.subr.mxu0 0.0
  %96 = vmatpush2.msra.mxu0 0.0
  %97 = vmatprep.subr.mxu0 0.0
  %98 = vmatpush2.msra.mxu0 0.0
  %99 = vmatprep.subr.mxu0 0.0
  %100 = vmatpush2.msra.mxu0 0.0
  %101 = vmatprep.subr.mxu0 0.0
  %102 = vmatpush2.msra.mxu0 0.0
  %103 = vmatprep.subr.mxu0 0.0
  %104 = vmatpush2.msra.mxu0 0.0
  %105 = vmatprep.mubr.f32.mxu0 0.0
  %106 = vmatmul.mubr.f32.gmra.mxu0 %v39
  %v107 = vpop.f32.mrf.mxu0
  %v108 = vadd.f32 %v35, %v107
  %v109 = vpop.f32.mrf.mxu0
  %110 = vdwg.mxu0
  %v111 = vmax.f32 %v108, 0.0
  %v112 = vld [vmem:[%s3] sm:$0xff]
  %v113 = vld [vmem:[%s3 + $0x8] sm:$0xff]
  %v114 = vld [vmem:[%s3 + $0x10] sm:$0xff]
  %v115 = vld [vmem:[%s3 + $0x18] sm:$0xff]
  %v116 = vld [vmem:[%s3 + $0x20] sm:$0xff]
  %v117 = vld [vmem:[%s3 + $0x28] sm:$0xff]
  %v118 = vld [vmem:[%s3 + $0x30] sm:$0xff]
  %v119 = vld [vmem:[%s3 + $0x38] sm:$0xff]
  %v120 = vld [vmem:[%s4] sm:$0x1]
  %v122 = vlaneseq
  %v123 = vshrl.u32 %v122, 7
  %v124 = vsub.s32 0, %v123
  %v125 = vrot.slane %v120, %v124
  %vm127 = vcmask 523264
  %v129 = vsel %vm127, %v111, 0
  %131 = vmatprep.subr.mxu0 0.0
  %132 = vmatpush1.msra.mxu0 0.0
  %133 = vmatprep.subr.mxu0 0.0
  %134 = vmatpush1.msra.mxu0 0.0
  %135 = vmatprep.subr.mxu0 0.0
  %136 = vmatpush1.msra.mxu0 0.0
  %137 = vmatprep.subr.mxu0 0.0
  %138 = vmatpush1.msra.mxu0 0.0
  %139 = vmatprep.subr.mxu0 0.0
  %140 = vmatpush1.msra.mxu0 0.0
  %141 = vmatprep.subr.mxu0 0.0
  %142 = vmatpush1.msra.mxu0 0.0
  %143 = vmatprep.subr.mxu0 0.0
  %144 = vmatpush1.msra.mxu0 0.0
  %145 = vmatprep.subr.mxu0 0.0
  %146 = vmatpush1.msra.mxu0 0.0
  %147 = vmatprep.subr.mxu0 0.0
  %148 = vmatpush1.msra.mxu0 %v119
  %149 = vmatprep.subr.mxu0 0.0
  %150 = vmatpush1.msra.mxu0 %v118
  %151 = vmatprep.subr.mxu0 0.0
  %152 = vmatpush1.msra.mxu0 %v117
  %153 = vmatprep.subr.mxu0 0.0
  %154 = vmatpush1.msra.mxu0 %v116
  %155 = vmatprep.subr.mxu0 0.0
  %156 = vmatpush1.msra.mxu0 %v115
  %157 = vmatprep.subr.mxu0 0.0
  %158 = vmatpush1.msra.mxu0 %v114
  %159 = vmatprep.subr.mxu0 0.0
  %160 = vmatpush1.msra.mxu0 %v113
  %161 = vmatprep.subr.mxu0 0.0
  %162 = vmatpush1.msra.mxu0 %v112
  %163 = vmatprep.subr.mxu0 0.0
  %164 = vmatpush2.msra.mxu0 0.0
  %165 = vmatprep.subr.mxu0 0.0
  %166 = vmatpush2.msra.mxu0 0.0
  %167 = vmatprep.subr.mxu0 0.0
  %168 = vmatpush2.msra.mxu0 0.0
  %169 = vmatprep.subr.mxu0 0.0
  %170 = vmatpush2.msra.mxu0 0.0
  %171 = vmatprep.subr.mxu0 0.0
  %172 = vmatpush2.msra.mxu0 0.0
  %173 = vmatprep.subr.mxu0 0.0
  %174 = vmatpush2.msra.mxu0 0.0
  %175 = vmatprep.subr.mxu0 0.0
  %176 = vmatpush2.msra.mxu0 0.0
  %177 = vmatprep.subr.mxu0 0.0
  %178 = vmatpush2.msra.mxu0 0.0
  %179 = vmatprep.subr.mxu0 0.0
  %180 = vmatpush2.msra.mxu0 0.0
  %181 = vmatprep.subr.mxu0 0.0
  %182 = vmatpush2.msra.mxu0 0.0
  %183 = vmatprep.subr.mxu0 0.0
  %184 = vmatpush2.msra.mxu0 0.0
  %185 = vmatprep.subr.mxu0 0.0
  %186 = vmatpush2.msra.mxu0 0.0
  %187 = vmatprep.subr.mxu0 0.0
  %188 = vmatpush2.msra.mxu0 0.0
  %189 = vmatprep.subr.mxu0 0.0
  %190 = vmatpush2.msra.mxu0 0.0
  %191 = vmatprep.subr.mxu0 0.0
  %192 = vmatpush2.msra.mxu0 0.0
  %193 = vmatprep.subr.mxu0 0.0
  %194 = vmatpush2.msra.mxu0 0.0
  %195 = vmatprep.mubr.f32.mxu0 0.0
  %196 = vmatmul.mubr.f32.gmra.mxu0 %v129
  %v197 = vpop.f32.mrf.mxu0
  %v198 = vadd.f32 %v125, %v197
  %v199 = vpop.f32.mrf.mxu0
  %200 = vdwg.mxu0
  %v201 = vmax.f32 %v198, 0.0
  %v202 = vld [vmem:[%s5] sm:$0xff]
  %v203 = vld [vmem:[%s5 + $0x8] sm:$0xff]
  %v204 = vld [vmem:[%s5 + $0x10] sm:$0xff]
  %v205 = vld [vmem:[%s5 + $0x18] sm:$0xff]
  %v206 = vld [vmem:[%s6] sm:$0x1]
  %v208 = vlaneseq
  %v209 = vshrl.u32 %v208, 7
  %v210 = vsub.s32 0, %v209
  %v211 = vrot.slane %v206, %v210
  %vm213 = vcmask 261120
  %v215 = vsel %vm213, %v201, 0
  %217 = vmatprep.subr.mxu0 0.0
  %218 = vmatpush1.msra.mxu0 0.0
  %219 = vmatprep.subr.mxu0 0.0
  %220 = vmatpush1.msra.mxu0 0.0
  %221 = vmatprep.subr.mxu0 0.0
  %222 = vmatpush1.msra.mxu0 0.0
  %223 = vmatprep.subr.mxu0 0.0
  %224 = vmatpush1.msra.mxu0 0.0
  %225 = vmatprep.subr.mxu0 0.0
  %226 = vmatpush1.msra.mxu0 0.0
  %227 = vmatprep.subr.mxu0 0.0
  %228 = vmatpush1.msra.mxu0 0.0
  %229 = vmatprep.subr.mxu0 0.0
  %230 = vmatpush1.msra.mxu0 0.0
  %231 = vmatprep.subr.mxu0 0.0
  %232 = vmatpush1.msra.mxu0 0.0
  %233 = vmatprep.subr.mxu0 0.0
  %234 = vmatpush1.msra.mxu0 0.0
  %235 = vmatprep.subr.mxu0 0.0
  %236 = vmatpush1.msra.mxu0 0.0
  %237 = vmatprep.subr.mxu0 0.0
  %238 = vmatpush1.msra.mxu0 0.0
  %239 = vmatprep.subr.mxu0 0.0
  %240 = vmatpush1.msra.mxu0 0.0
  %241 = vmatprep.subr.mxu0 0.0
  %242 = vmatpush1.msra.mxu0 %v205
  %243 = vmatprep.subr.mxu0 0.0
  %244 = vmatpush1.msra.mxu0 %v204
  %245 = vmatprep.subr.mxu0 0.0
  %246 = vmatpush1.msra.mxu0 %v203
  %247 = vmatprep.subr.mxu0 0.0
  %248 = vmatpush1.msra.mxu0 %v202
  %249 = vmatprep.subr.mxu0 0.0
  %250 = vmatpush2.msra.mxu0 0.0
  %251 = vmatprep.subr.mxu0 0.0
  %252 = vmatpush2.msra.mxu0 0.0
  %253 = vmatprep.subr.mxu0 0.0
  %254 = vmatpush2.msra.mxu0 0.0
  %255 = vmatprep.subr.mxu0 0.0
  %256 = vmatpush2.msra.mxu0 0.0
  %257 = vmatprep.subr.mxu0 0.0
  %258 = vmatpush2.msra.mxu0 0.0
  %259 = vmatprep.subr.mxu0 0.0
  %260 = vmatpush2.msra.mxu0 0.0
  %261 = vmatprep.subr.mxu0 0.0
  %262 = vmatpush2.msra.mxu0 0.0
  %263 = vmatprep.subr.mxu0 0.0
  %264 = vmatpush2.msra.mxu0 0.0
  %265 = vmatprep.subr.mxu0 0.0
  %266 = vmatpush2.msra.mxu0 0.0
  %267 = vmatprep.subr.mxu0 0.0
  %268 = vmatpush2.msra.mxu0 0.0
  %269 = vmatprep.subr.mxu0 0.0
  %270 = vmatpush2.msra.mxu0 0.0
  %271 = vmatprep.subr.mxu0 0.0
  %272 = vmatpush2.msra.mxu0 0.0
  %273 = vmatprep.subr.mxu0 0.0
  %274 = vmatpush2.msra.mxu0 0.0
  %275 = vmatprep.subr.mxu0 0.0
  %276 = vmatpush2.msra.mxu0 0.0
  %277 = vmatprep.subr.mxu0 0.0
  %278 = vmatpush2.msra.mxu0 0.0
  %279 = vmatprep.subr.mxu0 0.0
  %280 = vmatpush2.msra.mxu0 0.0
  %281 = vmatprep.mubr.f32.mxu0 0.0
  %282 = vmatmul.mubr.f32.gmra.mxu0 %v215
  %v283 = vpop.f32.mrf.mxu0
  %v284 = vadd.f32 %v211, %v283
  %v285 = vpop.f32.mrf.mxu0
  %286 = vdwg.mxu0
  %vm287 = vcmask 23552
  %288 = vst.msk [vmem:[%s7] sm:$0xff] %vm287, %v284
  // Predicated region
  $region30: #{tpu_custom_call.1} parent=0 // pred_check
    _
  $region31: #{tpu_custom_call.1} parent=0 // pred_check_branch
    %290 = sbr.rel (0) target = $region33
  $region32: #{tpu_custom_call.1} parent=0 // pred_region
    _
  $region33: #{tpu_custom_call.1} parent=0 // pred_fallthru
    _
  // Predicated region
  $region34: #{tpu_custom_call.1} parent=0 // pred_check
    _
  $region35: #{tpu_custom_call.1} parent=0 // pred_check_branch
    %292 = sbr.rel (0) target = $region37
  $region36: #{tpu_custom_call.1} parent=0 // pred_region
    _
  $region37: #{tpu_custom_call.1} parent=0 // pred_fallthru
    _

</llo_original>
